<compile_context>
chip_gen: v5e
topology: v5e:2x2
jax: 0.10.0
libtpu: 0.0.40
codegen_flags: <defaults>
</compile_context>

<pallas_src>
import jax
import jax.numpy as jnp
from jax.experimental import pallas as pl
from jax.experimental.pallas import tpu as pltpu

N_NODES = 16
NUM_NODE_FEATURES = 10
HIDDEN = 16
NUM_CLASSES = 2
NUM_TIME_STEPS = 5

F_PAD = 16  # node-feature dim padded to an 8-sublane multiple

# Row offsets of each tensor inside the packed (128, 128) f32 weight slab.
# Every tensor starts on an 8-sublane boundary; columns start at lane 0.
_ROW_W1, _ROW_B1 = 0, 16     # (F_PAD,Hc), (1,Hc)
_ROW_W2, _ROW_B2 = 24, 40    # (Hc,Hc),   (1,Hc)
_ROW_WG, _ROW_BG = 48, 64    # (Hc,3Hc),  (1,3Hc)   (lxbd folded in)
_ROW_LHZR = 72               # (Hc,2Hc)  [lzh|lrh]
_ROW_LHH = 88                # (Hc,Hc)
_ROW_WFC, _ROW_BFC = 104, 120  # (Hc,C), (1,C)
SLAB_ROWS = 128
SLAB_COLS = 128


def timeslice_gnn_kernel(probs_ref, a_ref, x_ref, w_ref, out_ref):
    T, N, Hc, C = NUM_TIME_STEPS, N_NODES, HIDDEN, NUM_CLASSES

    a = a_ref[...]                      # (T*N, T*N) block-diag normalized adjacency
    x = x_ref[...]                      # (T*N, F_PAD), zero-padded features

    def gcn(x_in, w, b):
        xw = jnp.dot(x_in, w, preferred_element_type=jnp.float32)
        return jnp.dot(a, xw, preferred_element_type=jnp.float32) + b

    # ---- h-independent precompute for all T slices at once (off the chain) ----
    w1 = w_ref[_ROW_W1:_ROW_W1 + F_PAD, 0:Hc]          # padded rows are zero
    b1 = w_ref[_ROW_B1:_ROW_B1 + 1, 0:Hc]
    x1 = jnp.maximum(gcn(x, w1, b1), 0.0)

    w2 = w_ref[_ROW_W2:_ROW_W2 + Hc, 0:Hc]
    b2 = w_ref[_ROW_B2:_ROW_B2 + 1, 0:Hc]
    x2 = jnp.maximum(gcn(x1, w2, b2), 0.0)

    # fused GRU gate conv with lxbd pre-folded on the host:
    #   gpre = A(x2 (Wg Lx)) + (bg Lx + blg)  ==  (A(x2 Wg) + bg) Lx + blg
    wg = w_ref[_ROW_WG:_ROW_WG + Hc, 0:3 * Hc]
    bg = w_ref[_ROW_BG:_ROW_BG + 1, 0:3 * Hc]
    gpre = gcn(x2, wg, bg)              # (T*N, 3Hc) = [z | r | h_tilde] preacts

    # only these two weights are used inside the sequential recurrence
    lhzr = w_ref[_ROW_LHZR:_ROW_LHZR + Hc, 0:2 * Hc]   # [lzh | lrh]
    lhh = w_ref[_ROW_LHH:_ROW_LHH + Hc, 0:Hc]

    # ---- sequential A3TGCN/TGCN GRU over time; 2 small dots per step ----
    h = jnp.zeros((N, Hc), jnp.float32)
    hacc = jnp.zeros((N, Hc), jnp.float32)
    for t in range(T):                                   # T = 5, fully unrolled
        g = gpre[t * N:(t + 1) * N, :]                   # static, 8-aligned slice
        ghzr = jnp.dot(h, lhzr, preferred_element_type=jnp.float32)   # (N,2Hc)
        zr = jax.nn.sigmoid(g[:, 0:2 * Hc] + ghzr)       # fused z|r sigmoid
        z = zr[:, 0:Hc]
        r = zr[:, Hc:2 * Hc]
        h_tilde = jnp.tanh(
            g[:, 2 * Hc:3 * Hc]
            + jnp.dot(h * r, lhh, preferred_element_type=jnp.float32))
        h = z * h + (1.0 - z) * h_tilde
        hacc = hacc + probs_ref[t] * h                   # attention accumulation

    # ---- finalize: fc + log_softmax over classes ----
    wfc = w_ref[_ROW_WFC:_ROW_WFC + Hc, 0:C]
    bfc = w_ref[_ROW_BFC:_ROW_BFC + 1, 0:C]
    logits = jnp.dot(hacc, wfc, preferred_element_type=jnp.float32) + bfc
    s = logits - jnp.max(logits, axis=1, keepdims=True)
    out_ref[...] = s - jnp.log(jnp.sum(jnp.exp(s), axis=1, keepdims=True))


# ------------------------ one-time host-side weight prep ------------------------

def fold_and_pack_weights(params):
    """Fold lxbd/blg into the fused gate conv and pack everything into one
    lane-dense (128,128) f32 slab.  Call ONCE at init, not per forward."""
    Hc = HIDDEN
    zero = jnp.zeros((Hc, Hc), jnp.float32)
    lxbd = jnp.concatenate([
        jnp.concatenate([params["lzx"], zero, zero], axis=1),
        jnp.concatenate([zero, params["lrx"], zero], axis=1),
        jnp.concatenate([zero, zero, params["lhx"]], axis=1)], axis=0)
    wg = jnp.concatenate([params["wz"], params["wr"], params["wh"]], axis=1)
    bg = jnp.concatenate([params["bz"], params["br"], params["bh"]], axis=1)
    blg = jnp.concatenate([params["blz"], params["blr"], params["blh"]], axis=1)
    wg_f = wg @ lxbd                       # (Hc, 3Hc)
    bg_f = bg @ lxbd + blg                 # (1, 3Hc)
    lhzr = jnp.concatenate([params["lzh"], params["lrh"]], axis=1)

    slab = jnp.zeros((SLAB_ROWS, SLAB_COLS), jnp.float32)

    def put(s, row, mat):
        return jax.lax.dynamic_update_slice(s, mat.astype(jnp.float32), (row, 0))

    slab = put(slab, _ROW_W1, params["w1"])     # (10,16); rows 10..15 stay zero
    slab = put(slab, _ROW_B1, params["b1"])
    slab = put(slab, _ROW_W2, params["w2"])
    slab = put(slab, _ROW_B2, params["b2"])
    slab = put(slab, _ROW_WG, wg_f)
    slab = put(slab, _ROW_BG, bg_f)
    slab = put(slab, _ROW_LHZR, lhzr)
    slab = put(slab, _ROW_LHH, params["lhh"])
    slab = put(slab, _ROW_WFC, params["wfc"])
    slab = put(slab, _ROW_BFC, params["bfc"])
    return slab


# ------------------------------- forward wrapper -------------------------------

@jax.jit
def time_slice_gnn(a_stack, x_stack, weight_slab, probs):
    T, N, Fdim = x_stack.shape
    Hc, C = HIDDEN, NUM_CLASSES
    TN = T * N

    # per-call data prep: block-diagonal adjacency over time + flat/padded features
    a_big = jnp.einsum("tij,ts->tisj", a_stack,
                       jnp.eye(T, dtype=a_stack.dtype)).reshape(TN, TN)
    x_flat = x_stack.reshape(TN, Fdim)
    x_flat = jnp.pad(x_flat, ((0, 0), (0, F_PAD - Fdim)))

    vmem = pl.BlockSpec(memory_space=pltpu.MemorySpace.VMEM)
    smem = pl.BlockSpec(memory_space=pltpu.MemorySpace.SMEM)

    cost = pl.CostEstimate(
        flops=2 * (TN * F_PAD * Hc + TN * TN * Hc            # gcn1
                   + TN * Hc * Hc + TN * TN * Hc             # gcn2
                   + TN * Hc * 3 * Hc + TN * TN * 3 * Hc     # fused gate conv
                   + T * (N * Hc * 2 * Hc + N * Hc * Hc)     # GRU recurrence
                   + N * Hc * C),                            # fc
        transcendentals=T * (N * 2 * Hc + N * Hc) + N * C,
        bytes_accessed=4 * (a_big.size + x_flat.size + weight_slab.size
                            + probs.size + N * C))

    return pl.pallas_call(
        timeslice_gnn_kernel,
        out_shape=jax.ShapeDtypeStruct((N, C), jnp.float32),
        in_specs=[smem,        # attention probabilities
                  vmem,        # block-diagonal adjacency (T*N, T*N)
                  vmem,        # flattened padded features (T*N, F_PAD)
                  vmem],       # packed weight slab (128, 128)
        out_specs=vmem,
        cost_estimate=cost,
    )(probs, a_big, x_flat, weight_slab)


# ------------------------------- plain-JAX glue --------------------------------

def normalized_adjacency(edge_index, num_nodes):
    """edge_index (2, E) -> dense D^-1/2 (A + I) D^-1/2."""
    src, dst = edge_index[0], edge_index[1]
    a = jnp.zeros((num_nodes, num_nodes), jnp.float32)
    a = a.at[src, dst].set(1.0)
    a = a.at[dst, src].set(1.0)               # undirected, GCN convention
    a = jnp.minimum(a + jnp.eye(num_nodes, dtype=jnp.float32), 1.0)
    deg = jnp.sum(a, axis=1)
    d_inv_sqrt = jax.lax.rsqrt(deg)
    return a * d_inv_sqrt[:, None] * d_inv_sqrt[None, :]


def init_params(key, f, hc, c, periods):
    keys = jax.random.split(key, 32)
    i = iter(range(32))

    def w(shape, scale=0.1):
        return (scale * jax.random.normal(keys[next(i)], shape)).astype(jnp.float32)

    attention = jnp.linspace(0.0, 1.0, periods, dtype=jnp.float32)  # A3TGCN _attention
    return {
        "w1": w((f, hc)),   "b1": w((1, hc)),
        "w2": w((hc, hc)),  "b2": w((1, hc)),
        "wz": w((hc, hc)),  "bz": w((1, hc)),
        "lzx": w((hc, hc)), "lzh": w((hc, hc)), "blz": w((1, hc)),
        "wr": w((hc, hc)),  "br": w((1, hc)),
        "lrx": w((hc, hc)), "lrh": w((hc, hc)), "blr": w((1, hc)),
        "wh": w((hc, hc)),  "bh": w((1, hc)),
        "lhx": w((hc, hc)), "lhh": w((hc, hc)), "blh": w((1, hc)),
        "wfc": w((hc, c)),  "bfc": w((1, c)),
        "probs": jax.nn.softmax(attention),
    }


if __name__ == "__main__":
    key = jax.random.PRNGKey(0)
    kx, ke, kp = jax.random.split(key, 3)

    T, N, Fdim = NUM_TIME_STEPS, N_NODES, NUM_NODE_FEATURES
    x_stack = jax.random.normal(kx, (T, N, Fdim), dtype=jnp.float32)

    num_edges = 40
    ekeys = jax.random.split(ke, T)
    a_stack = jnp.stack([
        normalized_adjacency(
            jax.random.randint(ekeys[t], (2, num_edges), 0, N), N)
        for t in range(T)
    ])

    params = init_params(kp, Fdim, HIDDEN, NUM_CLASSES, T)
    weight_slab = fold_and_pack_weights(params)   # once, outside the forward path
    weight_slab = jax.block_until_ready(weight_slab)

    out = time_slice_gnn(a_stack, x_stack, weight_slab, params["probs"])
    out = jax.block_until_ready(out)
    assert out.shape == (N, NUM_CLASSES)
    assert bool(jnp.all(jnp.isfinite(out)))
    # rows of log_softmax should exp-sum to 1
    assert bool(jnp.allclose(jnp.sum(jnp.exp(out), axis=1), 1.0, atol=1e-5))
    print("KERNEL_OK")
</pallas_src>

<mosaic_0001>
module attributes {stable_mosaic.version = 11 : i64} {
  func.func @timeslice_gnn_kernel(%arg0: memref<5xf32, #tpu.memory_space<smem>>, %arg1: memref<80x80xf32, #tpu.memory_space<vmem>>, %arg2: memref<80x16xf32, #tpu.memory_space<vmem>>, %arg3: memref<128x128xf32, #tpu.memory_space<vmem>>, %arg4: memref<16x2xf32, #tpu.memory_space<vmem>>) attributes {dimension_semantics = [], scalar_prefetch = 0 : i64, scratch_operands = 0 : i64, tpu.core_type = #tpu.core_type<tc>} {
    %c0 = arith.constant 0 : index
    %c0_0 = arith.constant 0 : index
    %0 = vector.load %arg1[%c0, %c0_0] : memref<80x80xf32, #tpu.memory_space<vmem>>, vector<80x80xf32>
    %c0_1 = arith.constant 0 : index
    %c0_2 = arith.constant 0 : index
    %1 = vector.load %arg2[%c0_1, %c0_2] : memref<80x16xf32, #tpu.memory_space<vmem>>, vector<80x16xf32>
    %c0_3 = arith.constant 0 : index
    %c0_4 = arith.constant 0 : index
    %2 = vector.load %arg3[%c0_3, %c0_4] : memref<128x128xf32, #tpu.memory_space<vmem>>, vector<16x16xf32>
    %c16 = arith.constant 16 : index
    %c0_5 = arith.constant 0 : index
    %3 = vector.load %arg3[%c16, %c0_5] : memref<128x128xf32, #tpu.memory_space<vmem>>, vector<1x16xf32>
    %cst = arith.constant dense<0.000000e+00> : vector<80x16xf32>
    %4 = tpu.matmul %1, %2, %cst {dimension_numbers = #tpu.dot_dimension_numbers<[1], [0], [0], [1], [0, 0, 1, 1], [], []>} : vector<80x16xf32>, vector<16x16xf32>, vector<80x16xf32> -> vector<80x16xf32>
    %cst_6 = arith.constant dense<0.000000e+00> : vector<80x16xf32>
    %5 = tpu.matmul %0, %4, %cst_6 {dimension_numbers = #tpu.dot_dimension_numbers<[1], [0], [0], [1], [0, 0, 1, 1], [], []>} : vector<80x80xf32>, vector<80x16xf32>, vector<80x16xf32> -> vector<80x16xf32>
    %6 = vector.broadcast %3 : vector<1x16xf32> to vector<80x16xf32>
    %7 = arith.addf %5, %6 : vector<80x16xf32>
    %cst_7 = arith.constant 0.000000e+00 : f32
    %8 = vector.broadcast %cst_7 : f32 to vector<80x16xf32>
    %9 = arith.maximumf %7, %8 : vector<80x16xf32>
    %c24 = arith.constant 24 : index
    %c0_8 = arith.constant 0 : index
    %10 = vector.load %arg3[%c24, %c0_8] : memref<128x128xf32, #tpu.memory_space<vmem>>, vector<16x16xf32>
    %c40 = arith.constant 40 : index
    %c0_9 = arith.constant 0 : index
    %11 = vector.load %arg3[%c40, %c0_9] : memref<128x128xf32, #tpu.memory_space<vmem>>, vector<1x16xf32>
    %cst_10 = arith.constant dense<0.000000e+00> : vector<80x16xf32>
    %12 = tpu.matmul %9, %10, %cst_10 {dimension_numbers = #tpu.dot_dimension_numbers<[1], [0], [0], [1], [0, 0, 1, 1], [], []>} : vector<80x16xf32>, vector<16x16xf32>, vector<80x16xf32> -> vector<80x16xf32>
    %cst_11 = arith.constant dense<0.000000e+00> : vector<80x16xf32>
    %13 = tpu.matmul %0, %12, %cst_11 {dimension_numbers = #tpu.dot_dimension_numbers<[1], [0], [0], [1], [0, 0, 1, 1], [], []>} : vector<80x80xf32>, vector<80x16xf32>, vector<80x16xf32> -> vector<80x16xf32>
    %14 = vector.broadcast %11 : vector<1x16xf32> to vector<80x16xf32>
    %15 = arith.addf %13, %14 : vector<80x16xf32>
    %cst_12 = arith.constant 0.000000e+00 : f32
    %16 = vector.broadcast %cst_12 : f32 to vector<80x16xf32>
    %17 = arith.maximumf %15, %16 : vector<80x16xf32>
    %c48 = arith.constant 48 : index
    %c0_13 = arith.constant 0 : index
    %18 = vector.load %arg3[%c48, %c0_13] : memref<128x128xf32, #tpu.memory_space<vmem>>, vector<16x48xf32>
    %c64 = arith.constant 64 : index
    %c0_14 = arith.constant 0 : index
    %19 = vector.load %arg3[%c64, %c0_14] : memref<128x128xf32, #tpu.memory_space<vmem>>, vector<1x48xf32>
    %cst_15 = arith.constant dense<0.000000e+00> : vector<80x48xf32>
    %20 = tpu.matmul %17, %18, %cst_15 {dimension_numbers = #tpu.dot_dimension_numbers<[1], [0], [0], [1], [0, 0, 1, 1], [], []>} : vector<80x16xf32>, vector<16x48xf32>, vector<80x48xf32> -> vector<80x48xf32>
    %cst_16 = arith.constant dense<0.000000e+00> : vector<80x48xf32>
    %21 = tpu.matmul %0, %20, %cst_16 {dimension_numbers = #tpu.dot_dimension_numbers<[1], [0], [0], [1], [0, 0, 1, 1], [], []>} : vector<80x80xf32>, vector<80x48xf32>, vector<80x48xf32> -> vector<80x48xf32>
    %22 = vector.broadcast %19 : vector<1x48xf32> to vector<80x48xf32>
    %23 = arith.addf %21, %22 : vector<80x48xf32>
    %c72 = arith.constant 72 : index
    %c0_17 = arith.constant 0 : index
    %24 = vector.load %arg3[%c72, %c0_17] : memref<128x128xf32, #tpu.memory_space<vmem>>, vector<16x32xf32>
    %c88 = arith.constant 88 : index
    %c0_18 = arith.constant 0 : index
    %25 = vector.load %arg3[%c88, %c0_18] : memref<128x128xf32, #tpu.memory_space<vmem>>, vector<16x16xf32>
    %cst_19 = arith.constant 0.000000e+00 : f32
    %26 = vector.broadcast %cst_19 : f32 to vector<16x16xf32>
    %cst_20 = arith.constant 0.000000e+00 : f32
    %27 = vector.broadcast %cst_20 : f32 to vector<16x16xf32>
    %28 = vector.extract_strided_slice %23 {offsets = [0, 0], sizes = [16, 48], strides = [1, 1]} : vector<80x48xf32> to vector<16x48xf32>
    %cst_21 = arith.constant dense<0.000000e+00> : vector<16x32xf32>
    %29 = tpu.matmul %26, %24, %cst_21 {dimension_numbers = #tpu.dot_dimension_numbers<[1], [0], [0], [1], [0, 0, 1, 1], [], []>} : vector<16x16xf32>, vector<16x32xf32>, vector<16x32xf32> -> vector<16x32xf32>
    %30 = vector.extract_strided_slice %28 {offsets = [0, 0], sizes = [16, 32], strides = [1, 1]} : vector<16x48xf32> to vector<16x32xf32>
    %31 = arith.addf %30, %29 : vector<16x32xf32>
    %32 = arith.negf %31 : vector<16x32xf32>
    %33 = math.exp %32 : vector<16x32xf32>
    %cst_22 = arith.constant 1.000000e+00 : f32
    %34 = vector.broadcast %cst_22 : f32 to vector<16x32xf32>
    %35 = arith.addf %34, %33 : vector<16x32xf32>
    %36 = arith.divf %34, %35 : vector<16x32xf32>
    %37 = vector.extract_strided_slice %36 {offsets = [0, 0], sizes = [16, 16], strides = [1, 1]} : vector<16x32xf32> to vector<16x16xf32>
    %38 = vector.extract_strided_slice %36 {offsets = [0, 16], sizes = [16, 16], strides = [1, 1]} : vector<16x32xf32> to vector<16x16xf32>
    %39 = vector.extract_strided_slice %28 {offsets = [0, 32], sizes = [16, 16], strides = [1, 1]} : vector<16x48xf32> to vector<16x16xf32>
    %40 = arith.mulf %26, %38 : vector<16x16xf32>
    %cst_23 = arith.constant dense<0.000000e+00> : vector<16x16xf32>
    %41 = tpu.matmul %40, %25, %cst_23 {dimension_numbers = #tpu.dot_dimension_numbers<[1], [0], [0], [1], [0, 0, 1, 1], [], []>} : vector<16x16xf32>, vector<16x16xf32>, vector<16x16xf32> -> vector<16x16xf32>
    %42 = arith.addf %39, %41 : vector<16x16xf32>
    %43 = math.tanh %42 : vector<16x16xf32>
    %44 = arith.mulf %37, %26 : vector<16x16xf32>
    %cst_24 = arith.constant 1.000000e+00 : f32
    %45 = vector.broadcast %cst_24 : f32 to vector<16x16xf32>
    %46 = arith.subf %45, %37 : vector<16x16xf32>
    %47 = arith.mulf %46, %43 : vector<16x16xf32>
    %48 = arith.addf %44, %47 : vector<16x16xf32>
    %c0_25 = arith.constant 0 : index
    %49 = memref.load %arg0[%c0_25] : memref<5xf32, #tpu.memory_space<smem>>
    %50 = vector.broadcast %49 : f32 to vector<16x16xf32>
    %51 = arith.mulf %50, %48 : vector<16x16xf32>
    %52 = arith.addf %27, %51 : vector<16x16xf32>
    %53 = vector.extract_strided_slice %23 {offsets = [16, 0], sizes = [16, 48], strides = [1, 1]} : vector<80x48xf32> to vector<16x48xf32>
    %cst_26 = arith.constant dense<0.000000e+00> : vector<16x32xf32>
    %54 = tpu.matmul %48, %24, %cst_26 {dimension_numbers = #tpu.dot_dimension_numbers<[1], [0], [0], [1], [0, 0, 1, 1], [], []>} : vector<16x16xf32>, vector<16x32xf32>, vector<16x32xf32> -> vector<16x32xf32>
    %55 = vector.extract_strided_slice %53 {offsets = [0, 0], sizes = [16, 32], strides = [1, 1]} : vector<16x48xf32> to vector<16x32xf32>
    %56 = arith.addf %55, %54 : vector<16x32xf32>
    %57 = arith.negf %56 : vector<16x32xf32>
    %58 = math.exp %57 : vector<16x32xf32>
    %cst_27 = arith.constant 1.000000e+00 : f32
    %59 = vector.broadcast %cst_27 : f32 to vector<16x32xf32>
    %60 = arith.addf %59, %58 : vector<16x32xf32>
    %61 = arith.divf %59, %60 : vector<16x32xf32>
    %62 = vector.extract_strided_slice %61 {offsets = [0, 0], sizes = [16, 16], strides = [1, 1]} : vector<16x32xf32> to vector<16x16xf32>
    %63 = vector.extract_strided_slice %61 {offsets = [0, 16], sizes = [16, 16], strides = [1, 1]} : vector<16x32xf32> to vector<16x16xf32>
    %64 = vector.extract_strided_slice %53 {offsets = [0, 32], sizes = [16, 16], strides = [1, 1]} : vector<16x48xf32> to vector<16x16xf32>
    %65 = arith.mulf %48, %63 : vector<16x16xf32>
    %cst_28 = arith.constant dense<0.000000e+00> : vector<16x16xf32>
    %66 = tpu.matmul %65, %25, %cst_28 {dimension_numbers = #tpu.dot_dimension_numbers<[1], [0], [0], [1], [0, 0, 1, 1], [], []>} : vector<16x16xf32>, vector<16x16xf32>, vector<16x16xf32> -> vector<16x16xf32>
    %67 = arith.addf %64, %66 : vector<16x16xf32>
    %68 = math.tanh %67 : vector<16x16xf32>
    %69 = arith.mulf %62, %48 : vector<16x16xf32>
    %cst_29 = arith.constant 1.000000e+00 : f32
    %70 = vector.broadcast %cst_29 : f32 to vector<16x16xf32>
    %71 = arith.subf %70, %62 : vector<16x16xf32>
    %72 = arith.mulf %71, %68 : vector<16x16xf32>
    %73 = arith.addf %69, %72 : vector<16x16xf32>
    %c1 = arith.constant 1 : index
    %74 = memref.load %arg0[%c1] : memref<5xf32, #tpu.memory_space<smem>>
    %75 = vector.broadcast %74 : f32 to vector<16x16xf32>
    %76 = arith.mulf %75, %73 : vector<16x16xf32>
    %77 = arith.addf %52, %76 : vector<16x16xf32>
    %78 = vector.extract_strided_slice %23 {offsets = [32, 0], sizes = [16, 48], strides = [1, 1]} : vector<80x48xf32> to vector<16x48xf32>
    %cst_30 = arith.constant dense<0.000000e+00> : vector<16x32xf32>
    %79 = tpu.matmul %73, %24, %cst_30 {dimension_numbers = #tpu.dot_dimension_numbers<[1], [0], [0], [1], [0, 0, 1, 1], [], []>} : vector<16x16xf32>, vector<16x32xf32>, vector<16x32xf32> -> vector<16x32xf32>
    %80 = vector.extract_strided_slice %78 {offsets = [0, 0], sizes = [16, 32], strides = [1, 1]} : vector<16x48xf32> to vector<16x32xf32>
    %81 = arith.addf %80, %79 : vector<16x32xf32>
    %82 = arith.negf %81 : vector<16x32xf32>
    %83 = math.exp %82 : vector<16x32xf32>
    %cst_31 = arith.constant 1.000000e+00 : f32
    %84 = vector.broadcast %cst_31 : f32 to vector<16x32xf32>
    %85 = arith.addf %84, %83 : vector<16x32xf32>
    %86 = arith.divf %84, %85 : vector<16x32xf32>
    %87 = vector.extract_strided_slice %86 {offsets = [0, 0], sizes = [16, 16], strides = [1, 1]} : vector<16x32xf32> to vector<16x16xf32>
    %88 = vector.extract_strided_slice %86 {offsets = [0, 16], sizes = [16, 16], strides = [1, 1]} : vector<16x32xf32> to vector<16x16xf32>
    %89 = vector.extract_strided_slice %78 {offsets = [0, 32], sizes = [16, 16], strides = [1, 1]} : vector<16x48xf32> to vector<16x16xf32>
    %90 = arith.mulf %73, %88 : vector<16x16xf32>
    %cst_32 = arith.constant dense<0.000000e+00> : vector<16x16xf32>
    %91 = tpu.matmul %90, %25, %cst_32 {dimension_numbers = #tpu.dot_dimension_numbers<[1], [0], [0], [1], [0, 0, 1, 1], [], []>} : vector<16x16xf32>, vector<16x16xf32>, vector<16x16xf32> -> vector<16x16xf32>
    %92 = arith.addf %89, %91 : vector<16x16xf32>
    %93 = math.tanh %92 : vector<16x16xf32>
    %94 = arith.mulf %87, %73 : vector<16x16xf32>
    %cst_33 = arith.constant 1.000000e+00 : f32
    %95 = vector.broadcast %cst_33 : f32 to vector<16x16xf32>
    %96 = arith.subf %95, %87 : vector<16x16xf32>
    %97 = arith.mulf %96, %93 : vector<16x16xf32>
    %98 = arith.addf %94, %97 : vector<16x16xf32>
    %c2 = arith.constant 2 : index
    %99 = memref.load %arg0[%c2] : memref<5xf32, #tpu.memory_space<smem>>
    %100 = vector.broadcast %99 : f32 to vector<16x16xf32>
    %101 = arith.mulf %100, %98 : vector<16x16xf32>
    %102 = arith.addf %77, %101 : vector<16x16xf32>
    %103 = vector.extract_strided_slice %23 {offsets = [48, 0], sizes = [16, 48], strides = [1, 1]} : vector<80x48xf32> to vector<16x48xf32>
    %cst_34 = arith.constant dense<0.000000e+00> : vector<16x32xf32>
    %104 = tpu.matmul %98, %24, %cst_34 {dimension_numbers = #tpu.dot_dimension_numbers<[1], [0], [0], [1], [0, 0, 1, 1], [], []>} : vector<16x16xf32>, vector<16x32xf32>, vector<16x32xf32> -> vector<16x32xf32>
    %105 = vector.extract_strided_slice %103 {offsets = [0, 0], sizes = [16, 32], strides = [1, 1]} : vector<16x48xf32> to vector<16x32xf32>
    %106 = arith.addf %105, %104 : vector<16x32xf32>
    %107 = arith.negf %106 : vector<16x32xf32>
    %108 = math.exp %107 : vector<16x32xf32>
    %cst_35 = arith.constant 1.000000e+00 : f32
    %109 = vector.broadcast %cst_35 : f32 to vector<16x32xf32>
    %110 = arith.addf %109, %108 : vector<16x32xf32>
    %111 = arith.divf %109, %110 : vector<16x32xf32>
    %112 = vector.extract_strided_slice %111 {offsets = [0, 0], sizes = [16, 16], strides = [1, 1]} : vector<16x32xf32> to vector<16x16xf32>
    %113 = vector.extract_strided_slice %111 {offsets = [0, 16], sizes = [16, 16], strides = [1, 1]} : vector<16x32xf32> to vector<16x16xf32>
    %114 = vector.extract_strided_slice %103 {offsets = [0, 32], sizes = [16, 16], strides = [1, 1]} : vector<16x48xf32> to vector<16x16xf32>
    %115 = arith.mulf %98, %113 : vector<16x16xf32>
    %cst_36 = arith.constant dense<0.000000e+00> : vector<16x16xf32>
    %116 = tpu.matmul %115, %25, %cst_36 {dimension_numbers = #tpu.dot_dimension_numbers<[1], [0], [0], [1], [0, 0, 1, 1], [], []>} : vector<16x16xf32>, vector<16x16xf32>, vector<16x16xf32> -> vector<16x16xf32>
    %117 = arith.addf %114, %116 : vector<16x16xf32>
    %118 = math.tanh %117 : vector<16x16xf32>
    %119 = arith.mulf %112, %98 : vector<16x16xf32>
    %cst_37 = arith.constant 1.000000e+00 : f32
    %120 = vector.broadcast %cst_37 : f32 to vector<16x16xf32>
    %121 = arith.subf %120, %112 : vector<16x16xf32>
    %122 = arith.mulf %121, %118 : vector<16x16xf32>
    %123 = arith.addf %119, %122 : vector<16x16xf32>
    %c3 = arith.constant 3 : index
    %124 = memref.load %arg0[%c3] : memref<5xf32, #tpu.memory_space<smem>>
    %125 = vector.broadcast %124 : f32 to vector<16x16xf32>
    %126 = arith.mulf %125, %123 : vector<16x16xf32>
    %127 = arith.addf %102, %126 : vector<16x16xf32>
    %128 = vector.extract_strided_slice %23 {offsets = [64, 0], sizes = [16, 48], strides = [1, 1]} : vector<80x48xf32> to vector<16x48xf32>
    %cst_38 = arith.constant dense<0.000000e+00> : vector<16x32xf32>
    %129 = tpu.matmul %123, %24, %cst_38 {dimension_numbers = #tpu.dot_dimension_numbers<[1], [0], [0], [1], [0, 0, 1, 1], [], []>} : vector<16x16xf32>, vector<16x32xf32>, vector<16x32xf32> -> vector<16x32xf32>
    %130 = vector.extract_strided_slice %128 {offsets = [0, 0], sizes = [16, 32], strides = [1, 1]} : vector<16x48xf32> to vector<16x32xf32>
    %131 = arith.addf %130, %129 : vector<16x32xf32>
    %132 = arith.negf %131 : vector<16x32xf32>
    %133 = math.exp %132 : vector<16x32xf32>
    %cst_39 = arith.constant 1.000000e+00 : f32
    %134 = vector.broadcast %cst_39 : f32 to vector<16x32xf32>
    %135 = arith.addf %134, %133 : vector<16x32xf32>
    %136 = arith.divf %134, %135 : vector<16x32xf32>
    %137 = vector.extract_strided_slice %136 {offsets = [0, 0], sizes = [16, 16], strides = [1, 1]} : vector<16x32xf32> to vector<16x16xf32>
    %138 = vector.extract_strided_slice %136 {offsets = [0, 16], sizes = [16, 16], strides = [1, 1]} : vector<16x32xf32> to vector<16x16xf32>
    %139 = vector.extract_strided_slice %128 {offsets = [0, 32], sizes = [16, 16], strides = [1, 1]} : vector<16x48xf32> to vector<16x16xf32>
    %140 = arith.mulf %123, %138 : vector<16x16xf32>
    %cst_40 = arith.constant dense<0.000000e+00> : vector<16x16xf32>
    %141 = tpu.matmul %140, %25, %cst_40 {dimension_numbers = #tpu.dot_dimension_numbers<[1], [0], [0], [1], [0, 0, 1, 1], [], []>} : vector<16x16xf32>, vector<16x16xf32>, vector<16x16xf32> -> vector<16x16xf32>
    %142 = arith.addf %139, %141 : vector<16x16xf32>
    %143 = math.tanh %142 : vector<16x16xf32>
    %144 = arith.mulf %137, %123 : vector<16x16xf32>
    %cst_41 = arith.constant 1.000000e+00 : f32
    %145 = vector.broadcast %cst_41 : f32 to vector<16x16xf32>
    %146 = arith.subf %145, %137 : vector<16x16xf32>
    %147 = arith.mulf %146, %143 : vector<16x16xf32>
    %148 = arith.addf %144, %147 : vector<16x16xf32>
    %c4 = arith.constant 4 : index
    %149 = memref.load %arg0[%c4] : memref<5xf32, #tpu.memory_space<smem>>
    %150 = vector.broadcast %149 : f32 to vector<16x16xf32>
    %151 = arith.mulf %150, %148 : vector<16x16xf32>
    %152 = arith.addf %127, %151 : vector<16x16xf32>
    %c104 = arith.constant 104 : index
    %c0_42 = arith.constant 0 : index
    %153 = vector.load %arg3[%c104, %c0_42] : memref<128x128xf32, #tpu.memory_space<vmem>>, vector<16x2xf32>
    %c120 = arith.constant 120 : index
    %c0_43 = arith.constant 0 : index
    %154 = vector.load %arg3[%c120, %c0_43] : memref<128x128xf32, #tpu.memory_space<vmem>>, vector<1x2xf32>
    %cst_44 = arith.constant dense<0.000000e+00> : vector<16x2xf32>
    %155 = tpu.matmul %152, %153, %cst_44 {dimension_numbers = #tpu.dot_dimension_numbers<[1], [0], [0], [1], [0, 0, 1, 1], [], []>} : vector<16x16xf32>, vector<16x2xf32>, vector<16x2xf32> -> vector<16x2xf32>
    %156 = vector.broadcast %154 : vector<1x2xf32> to vector<16x2xf32>
    %157 = arith.addf %155, %156 : vector<16x2xf32>
    %cst_45 = arith.constant dense<0xFF800000> : vector<16xf32>
    %158 = vector.multi_reduction <maximumf>, %157, %cst_45 [1] : vector<16x2xf32> to vector<16xf32>
    %159 = vector.shape_cast %158 : vector<16xf32> to vector<16x1xf32>
    %160 = vector.broadcast %159 : vector<16x1xf32> to vector<16x2xf32>
    %161 = arith.subf %157, %160 : vector<16x2xf32>
    %162 = math.exp %161 : vector<16x2xf32>
    %cst_46 = arith.constant dense<0.000000e+00> : vector<16xf32>
    %163 = vector.multi_reduction <add>, %162, %cst_46 [1] : vector<16x2xf32> to vector<16xf32>
    %164 = vector.shape_cast %163 : vector<16xf32> to vector<16x1xf32>
    %165 = math.log %164 : vector<16x1xf32>
    %166 = vector.broadcast %165 : vector<16x1xf32> to vector<16x2xf32>
    %167 = arith.subf %161, %166 : vector<16x2xf32>
    %c0_47 = arith.constant 0 : index
    %c0_48 = arith.constant 0 : index
    %168 = vector.load %arg4[%c0_47, %c0_48] : memref<16x2xf32, #tpu.memory_space<vmem>>, vector<16x2xf32>
    tpu.vector_store %arg4[%c0_47, %c0_48], %167 {strides = array<i32>} : memref<16x2xf32, #tpu.memory_space<vmem>>, vector<16x2xf32>,
    return
  }
}

</mosaic_0001>

<llo_original>
// kernel: time_slice_gnn.1
$region0: #{time_slice_gnn.1}
  #allocation0 [shape = 'u32[]', space=smem, size = 0x4, offset = 0x4, fixed_abs, tag = 'smem constant byte address 0x4 - core index']
  #allocation1 [shape = 'u32[72,128]{1,0:T(1,128)}', space=vmem, size = 0x9000, scoped, tag = 'internal scratch']
  %s0 = inlined_call_operand.vmem [shape: f32[5], index: 0, kind: input, shape index: {}]
  %s1 = inlined_call_operand.vmem [shape: f32[80,80], index: 1, kind: input, shape index: {}]
  %s2 = inlined_call_operand.vmem [shape: f32[80,16], index: 2, kind: input, shape index: {}]
  %s3 = inlined_call_operand.vmem [shape: f32[128,128], index: 3, kind: input, shape index: {}]
  %s4 = inlined_call_operand.vmem [shape: f32[16,2], index: 4, kind: output, shape index: {}]
  %s5 = sld [smem:[#allocation0]]
  $region30: #{time_slice_gnn.1} parent=0
    _
  %s7 = ssub.s32 1, %s5
  %s8 = scalar_select 0, %s7, %s5
  $region1: #{time_slice_gnn.1} parent=0
    #allocation2 [shape = 'u8[512]{0}', space=smem, size = 0x200, scoped, tag = 'input window, operand 0, single buffered']
    #allocation3 [shape = 's32[1]{0}', space=sflag, size = 0x4, scoped, tag = 'scoped memory for time_slice_gnn.1']
    %9 = vsyncpa [#allocation3], 0
    // Predicated region
    $region2: #{time_slice_gnn.1} parent=1 // pred_check
      _
    $region3: #{time_slice_gnn.1} parent=1 // pred_check_branch
      %11 = sbr.rel (0) target = $region5
    $region4: #{time_slice_gnn.1} parent=1 // pred_region
      %13 = vsyncadd [#allocation3], 0
      %s15 = sshll.u32 %s0, 4
      %s16 = int_to_ptr.vmem [resolvable:$true] %s15
      %18 = dma.vmem_to_smem %s16, 16, [#allocation2], [#allocation3]
    $region5: #{time_slice_gnn.1} parent=1 // pred_fallthru
      _
    // Predicated region
    $region6: #{time_slice_gnn.1} parent=1 // pred_check
      _
    $region7: #{time_slice_gnn.1} parent=1 // pred_check_branch
      %20 = sbr.rel (0) target = $region9
    $region8: #{time_slice_gnn.1} parent=1 // pred_region
      _
    $region9: #{time_slice_gnn.1} parent=1 // pred_fallthru
      _
    // Predicated region
    $region10: #{time_slice_gnn.1} parent=1 // pred_check
      _
    $region11: #{time_slice_gnn.1} parent=1 // pred_check_branch
      %22 = sbr.rel (0) target = $region13
    $region12: #{time_slice_gnn.1} parent=1 // pred_region
      _
    $region13: #{time_slice_gnn.1} parent=1 // pred_fallthru
      _
    // Predicated region
    $region14: #{time_slice_gnn.1} parent=1 // pred_check
      _
    $region15: #{time_slice_gnn.1} parent=1 // pred_check_branch
      %24 = sbr.rel (0) target = $region17
    $region16: #{time_slice_gnn.1} parent=1 // pred_region
      _
    $region17: #{time_slice_gnn.1} parent=1 // pred_fallthru
      _
    // Predicated region
    $region18: #{time_slice_gnn.1} parent=1 // pred_check
      _
    $region19: #{time_slice_gnn.1} parent=1 // pred_check_branch
      %26 = sbr.rel (0) target = $region21
    $region20: #{time_slice_gnn.1} parent=1 // pred_region
      %28 = dma.done [#allocation3], 16
    $region21: #{time_slice_gnn.1} parent=1 // pred_fallthru
      _
    %29 = sfence
    %v30 = vld [vmem:[%s1] sm:$0xff]
    %v31 = vld [vmem:[%s1 + $0x8] sm:$0xff]
    %v32 = vld [vmem:[%s1 + $0x10] sm:$0xff]
    %v33 = vld [vmem:[%s1 + $0x18] sm:$0xff]
    %v34 = vld [vmem:[%s1 + $0x20] sm:$0xff]
    %v35 = vld [vmem:[%s1 + $0x28] sm:$0xff]
    %v36 = vld [vmem:[%s1 + $0x30] sm:$0xff]
    %v37 = vld [vmem:[%s1 + $0x38] sm:$0xff]
    %v38 = vld [vmem:[%s1 + $0x40] sm:$0xff]
    %v39 = vld [vmem:[%s1 + $0x48] sm:$0xff]
    %v40 = vld [vmem:[%s2] sm:$0xff]
    %v41 = vld [vmem:[%s2 + $0x8] sm:$0xff]
    %v42 = vld [vmem:[%s2 + $0x10] sm:$0xff]
    %v43 = vld [vmem:[%s2 + $0x18] sm:$0xff]
    %v44 = vld [vmem:[%s2 + $0x20] sm:$0xff]
    %v45 = vld [vmem:[%s2 + $0x28] sm:$0xff]
    %v46 = vld [vmem:[%s2 + $0x30] sm:$0xff]
    %v47 = vld [vmem:[%s2 + $0x38] sm:$0xff]
    %v48 = vld [vmem:[%s2 + $0x40] sm:$0xff]
    %v49 = vld [vmem:[%s2 + $0x48] sm:$0xff]
    %v50 = vld [vmem:[%s3] sm:$0xff]
    %v51 = vld [vmem:[%s3 + $0x8] sm:$0xff]
    %v52 = vld [vmem:[%s3 + $0x10] sm:$0x1]
    %vm53 = vcmask 130048
    %v55 = vsel %vm53, %v40, 0
    %v58 = vsel %vm53, %v41, 0
    %v61 = vsel %vm53, %v42, 0
    %v64 = vsel %vm53, %v43, 0
    %v67 = vsel %vm53, %v44, 0
    %v70 = vsel %vm53, %v45, 0
    %v73 = vsel %vm53, %v46, 0
    %v76 = vsel %vm53, %v47, 0
    %v79 = vsel %vm53, %v48, 0
    %v82 = vsel %vm53, %v49, 0
    %84 = vmatpush.msra.mxu0 0.0
    %85 = vmatpush.msra.mxu0 0.0
    %86 = vmatpush.msra.mxu0 0.0
    %87 = vmatpush.msra.mxu0 0.0
    %88 = vmatpush.msra.mxu0 0.0
    %89 = vmatpush.msra.mxu0 0.0
    %90 = vmatpush.msra.mxu0 0.0
    %91 = vmatpush.msra.mxu0 0.0
    %92 = vmatpush.msra.mxu0 0.0
    %93 = vmatpush.msra.mxu0 0.0
    %94 = vmatpush.msra.mxu0 0.0
    %95 = vmatpush.msra.mxu0 0.0
    %96 = vmatpush.msra.mxu0 0.0
    %97 = vmatpush.msra.mxu0 0.0
    %98 = vmatpush.msra.mxu0 %v51
    %99 = vmatpush.msra.mxu0 %v50
    %100 = vmatmul.f32.gmra.mxu0 %v55
    %v101 = vpop.f32.mrf.mxu0
    %v102 = vadd.f32 0.0, %v101
    %103 = vmatmul.f32.gmra.mxu0 %v58
    %v104 = vpop.f32.mrf.mxu0
    %v105 = vadd.f32 0.0, %v104
    %106 = vmatmul.f32.gmra.mxu0 %v61
    %v107 = vpop.f32.mrf.mxu0
    %v108 = vadd.f32 0.0, %v107
    %109 = vmatmul.f32.gmra.mxu0 %v64
    %v110 = vpop.f32.mrf.mxu0
    %v111 = vadd.f32 0.0, %v110
    %112 = vmatmul.f32.gmra.mxu0 %v67
    %v113 = vpop.f32.mrf.mxu0
    %v114 = vadd.f32 0.0, %v113
    %115 = vmatmul.f32.gmra.mxu0 %v70
    %v116 = vpop.f32.mrf.mxu0
    %v117 = vadd.f32 0.0, %v116
    %118 = vmatmul.f32.gmra.mxu0 %v73
    %v119 = vpop.f32.mrf.mxu0
    %v120 = vadd.f32 0.0, %v119
    %121 = vmatmul.f32.gmra.mxu0 %v76
    %v122 = vpop.f32.mrf.mxu0
    %v123 = vadd.f32 0.0, %v122
    %124 = vmatmul.f32.gmra.mxu0 %v79
    %v125 = vpop.f32.mrf.mxu0
    %v126 = vadd.f32 0.0, %v125
    %127 = vmatmul.f32.gmra.mxu0 %v82
    %v128 = vpop.f32.mrf.mxu0
    %v129 = vadd.f32 0.0, %v128
    %130 = vdwg.mxu0
    %v131 = vperm.slane %v52, 0
    %vm132 = vcmask 654336
    %v134 = vsel %vm132, %v30, 0
    %v137 = vsel %vm132, %v31, 0
    %v140 = vsel %vm132, %v32, 0
    %v143 = vsel %vm132, %v33, 0
    %v146 = vsel %vm132, %v34, 0
    %v149 = vsel %vm132, %v35, 0
    %v152 = vsel %vm132, %v36, 0
    %v155 = vsel %vm132, %v37, 0
    %v158 = vsel %vm132, %v38, 0
    %v161 = vsel %vm132, %v39, 0
    %163 = vmatpush.msra.mxu0 0.0
    %164 = vmatpush.msra.mxu0 0.0
    %165 = vmatpush.msra.mxu0 0.0
    %166 = vmatpush.msra.mxu0 0.0
    %167 = vmatpush.msra.mxu0 0.0
    %168 = vmatpush.msra.mxu0 0.0
    %169 = vmatpush.msra.mxu0 %v129
    %170 = vmatpush.msra.mxu0 %v126
    %171 = vmatpush.msra.mxu0 %v123
    %172 = vmatpush.msra.mxu0 %v120
    %173 = vmatpush.msra.mxu0 %v117
    %174 = vmatpush.msra.mxu0 %v114
    %175 = vmatpush.msra.mxu0 %v111
    %176 = vmatpush.msra.mxu0 %v108
    %177 = vmatpush.msra.mxu0 %v105
    %178 = vmatpush.msra.mxu0 %v102
    %179 = vmatmul.f32.gmra.mxu0 %v134
    %v180 = vpop.f32.mrf.mxu0
    %v181 = vadd.f32 %v131, %v180
    %182 = vmatmul.f32.gmra.mxu0 %v137
    %v183 = vpop.f32.mrf.mxu0
    %v184 = vadd.f32 %v131, %v183
    %185 = vmatmul.f32.gmra.mxu0 %v140
    %v186 = vpop.f32.mrf.mxu0
    %v187 = vadd.f32 %v131, %v186
    %188 = vmatmul.f32.gmra.mxu0 %v143
    %v189 = vpop.f32.mrf.mxu0
    %v190 = vadd.f32 %v131, %v189
    %191 = vmatmul.f32.gmra.mxu0 %v146
    %v192 = vpop.f32.mrf.mxu0
    %v193 = vadd.f32 %v131, %v192
    %194 = vmatmul.f32.gmra.mxu0 %v149
    %v195 = vpop.f32.mrf.mxu0
    %v196 = vadd.f32 %v131, %v195
    %197 = vmatmul.f32.gmra.mxu0 %v152
    %v198 = vpop.f32.mrf.mxu0
    %v199 = vadd.f32 %v131, %v198
    %200 = vmatmul.f32.gmra.mxu0 %v155
    %v201 = vpop.f32.mrf.mxu0
    %v202 = vadd.f32 %v131, %v201
    %203 = vmatmul.f32.gmra.mxu0 %v158
    %v204 = vpop.f32.mrf.mxu0
    %v205 = vadd.f32 %v131, %v204
    %206 = vmatmul.f32.gmra.mxu0 %v161
    %v207 = vpop.f32.mrf.mxu0
    %v208 = vadd.f32 %v131, %v207
    %209 = vdwg.mxu0
    %v210 = vmax.f32 %v181, 0.0
    %v211 = vmax.f32 %v184, 0.0
    %v212 = vmax.f32 %v187, 0.0
    %v213 = vmax.f32 %v190, 0.0
    %v214 = vmax.f32 %v193, 0.0
    %v215 = vmax.f32 %v196, 0.0
    %v216 = vmax.f32 %v199, 0.0
    %v217 = vmax.f32 %v202, 0.0
    %v218 = vmax.f32 %v205, 0.0
    %v219 = vmax.f32 %v208, 0.0
    %v220 = vld [vmem:[%s3 + $0x18] sm:$0xff]
    %v221 = vld [vmem:[%s3 + $0x20] sm:$0xff]
    %v222 = vld [vmem:[%s3 + $0x28] sm:$0x1]
    %v224 = vsel %vm53, %v210, 0
    %v227 = vsel %vm53, %v211, 0
    %v230 = vsel %vm53, %v212, 0
    %v233 = vsel %vm53, %v213, 0
    %v236 = vsel %vm53, %v214, 0
    %v239 = vsel %vm53, %v215, 0
    %v242 = vsel %vm53, %v216, 0
    %v245 = vsel %vm53, %v217, 0
    %v248 = vsel %vm53, %v218, 0
    %v251 = vsel %vm53, %v219, 0
    %253 = vmatpush.msra.mxu0 0.0
    %254 = vmatpush.msra.mxu0 0.0
    %255 = vmatpush.msra.mxu0 0.0
    %256 = vmatpush.msra.mxu0 0.0
    %257 = vmatpush.msra.mxu0 0.0
    %258 = vmatpush.msra.mxu0 0.0
    %259 = vmatpush.msra.mxu0 0.0
    %260 = vmatpush.msra.mxu0 0.0
    %261 = vmatpush.msra.mxu0 0.0
    %262 = vmatpush.msra.mxu0 0.0
    %263 = vmatpush.msra.mxu0 0.0
    %264 = vmatpush.msra.mxu0 0.0
    %265 = vmatpush.msra.mxu0 0.0
    %266 = vmatpush.msra.mxu0 0.0
    %267 = vmatpush.msra.mxu0 %v221
    %268 = vmatpush.msra.mxu0 %v220
    %269 = vmatmul.f32.gmra.mxu0 %v224
    %v270 = vpop.f32.mrf.mxu0
    %v271 = vadd.f32 0.0, %v270
    %272 = vmatmul.f32.gmra.mxu0 %v227
    %v273 = vpop.f32.mrf.mxu0
    %v274 = vadd.f32 0.0, %v273
    %275 = vmatmul.f32.gmra.mxu0 %v230
    %v276 = vpop.f32.mrf.mxu0
    %v277 = vadd.f32 0.0, %v276
    %278 = vmatmul.f32.gmra.mxu0 %v233
    %v279 = vpop.f32.mrf.mxu0
    %v280 = vadd.f32 0.0, %v279
    %281 = vmatmul.f32.gmra.mxu0 %v236
    %v282 = vpop.f32.mrf.mxu0
    %v283 = vadd.f32 0.0, %v282
    %284 = vmatmul.f32.gmra.mxu0 %v239
    %v285 = vpop.f32.mrf.mxu0
    %v286 = vadd.f32 0.0, %v285
    %287 = vmatmul.f32.gmra.mxu0 %v242
    %v288 = vpop.f32.mrf.mxu0
    %v289 = vadd.f32 0.0, %v288
    %290 = vmatmul.f32.gmra.mxu0 %v245
    %v291 = vpop.f32.mrf.mxu0
    %v292 = vadd.f32 0.0, %v291
    %293 = vmatmul.f32.gmra.mxu0 %v248
    %v294 = vpop.f32.mrf.mxu0
    %v295 = vadd.f32 0.0, %v294
    %296 = vmatmul.f32.gmra.mxu0 %v251
    %v297 = vpop.f32.mrf.mxu0
    %v298 = vadd.f32 0.0, %v297
    %299 = vdwg.mxu0
    %v300 = vperm.slane %v222, 0
    %301 = vmatpush.msra.mxu0 0.0
    %302 = vmatpush.msra.mxu0 0.0
    %303 = vmatpush.msra.mxu0 0.0
    %304 = vmatpush.msra.mxu0 0.0
    %305 = vmatpush.msra.mxu0 0.0
    %306 = vmatpush.msra.mxu0 0.0
    %307 = vmatpush.msra.mxu0 %v298
    %308 = vmatpush.msra.mxu0 %v295
    %309 = vmatpush.msra.mxu0 %v292
    %310 = vmatpush.msra.mxu0 %v289
    %311 = vmatpush.msra.mxu0 %v286
    %312 = vmatpush.msra.mxu0 %v283
    %313 = vmatpush.msra.mxu0 %v280
    %314 = vmatpush.msra.mxu0 %v277
    %315 = vmatpush.msra.mxu0 %v274
    %316 = vmatpush.msra.mxu0 %v271
    %317 = vmatmul.f32.gmra.mxu0 %v134
    %v318 = vpop.f32.mrf.mxu0
    %v319 = vadd.f32 %v300, %v318
    %320 = vmatmul.f32.gmra.mxu0 %v137
    %v321 = vpop.f32.mrf.mxu0
    %v322 = vadd.f32 %v300, %v321
    %323 = vmatmul.f32.gmra.mxu0 %v140
    %v324 = vpop.f32.mrf.mxu0
    %v325 = vadd.f32 %v300, %v324
    %326 = vmatmul.f32.gmra.mxu0 %v143
    %v327 = vpop.f32.mrf.mxu0
    %v328 = vadd.f32 %v300, %v327
    %329 = vmatmul.f32.gmra.mxu0 %v146
    %v330 = vpop.f32.mrf.mxu0
    %v331 = vadd.f32 %v300, %v330
    %332 = vmatmul.f32.gmra.mxu0 %v149
    %v333 = vpop.f32.mrf.mxu0
    %v334 = vadd.f32 %v300, %v333
    %335 = vmatmul.f32.gmra.mxu0 %v152
    %v336 = vpop.f32.mrf.mxu0
    %v337 = vadd.f32 %v300, %v336
    %338 = vmatmul.f32.gmra.mxu0 %v155
    %v339 = vpop.f32.mrf.mxu0
    %v340 = vadd.f32 %v300, %v339
    %341 = vmatmul.f32.gmra.mxu0 %v158
    %v342 = vpop.f32.mrf.mxu0
    %v343 = vadd.f32 %v300, %v342
    %344 = vmatmul.f32.gmra.mxu0 %v161
    %v345 = vpop.f32.mrf.mxu0
    %v346 = vadd.f32 %v300, %v345
    %347 = vdwg.mxu0
    %v348 = vmax.f32 %v319, 0.0
    %v349 = vmax.f32 %v322, 0.0
    %v350 = vmax.f32 %v325, 0.0
    %v351 = vmax.f32 %v328, 0.0
    %v352 = vmax.f32 %v331, 0.0
    %v353 = vmax.f32 %v334, 0.0
    %v354 = vmax.f32 %v337, 0.0
    %v355 = vmax.f32 %v340, 0.0
    %v356 = vmax.f32 %v343, 0.0
    %v357 = vmax.f32 %v346, 0.0
    %v358 = vld [vmem:[%s3 + $0x30] sm:$0xff]
    %v359 = vld [vmem:[%s3 + $0x38] sm:$0xff]
    %v360 = vld [vmem:[%s3 + $0x40] sm:$0x1]
    %v362 = vsel %vm53, %v348, 0
    %v365 = vsel %vm53, %v349, 0
    %v368 = vsel %vm53, %v350, 0
    %v371 = vsel %vm53, %v351, 0
    %v374 = vsel %vm53, %v352, 0
    %v377 = vsel %vm53, %v353, 0
    %v380 = vsel %vm53, %v354, 0
    %v383 = vsel %vm53, %v355, 0
    %v386 = vsel %vm53, %v356, 0
    %v389 = vsel %vm53, %v357, 0
    %391 = vmatpush.msra.mxu0 0.0
    %392 = vmatpush.msra.mxu0 0.0
    %393 = vmatpush.msra.mxu0 0.0
    %394 = vmatpush.msra.mxu0 0.0
    %395 = vmatpush.msra.mxu0 0.0
    %396 = vmatpush.msra.mxu0 0.0
    %397 = vmatpush.msra.mxu0 0.0
    %398 = vmatpush.msra.mxu0 0.0
    %399 = vmatpush.msra.mxu0 0.0
    %400 = vmatpush.msra.mxu0 0.0
    %401 = vmatpush.msra.mxu0 0.0
    %402 = vmatpush.msra.mxu0 0.0
    %403 = vmatpush.msra.mxu0 0.0
    %404 = vmatpush.msra.mxu0 0.0
    %405 = vmatpush.msra.mxu0 %v359
    %406 = vmatpush.msra.mxu0 %v358
    %407 = vmatmul.f32.gmra.mxu0 %v362
    %v408 = vpop.f32.mrf.mxu0
    %v409 = vadd.f32 0.0, %v408
    %410 = vmatmul.f32.gmra.mxu0 %v365
    %v411 = vpop.f32.mrf.mxu0
    %v412 = vadd.f32 0.0, %v411
    %413 = vmatmul.f32.gmra.mxu0 %v368
    %v414 = vpop.f32.mrf.mxu0
    %v415 = vadd.f32 0.0, %v414
    %416 = vmatmul.f32.gmra.mxu0 %v371
    %v417 = vpop.f32.mrf.mxu0
    %v418 = vadd.f32 0.0, %v417
    %419 = vmatmul.f32.gmra.mxu0 %v374
    %v420 = vpop.f32.mrf.mxu0
    %v421 = vadd.f32 0.0, %v420
    %422 = vmatmul.f32.gmra.mxu0 %v377
    %v423 = vpop.f32.mrf.mxu0
    %v424 = vadd.f32 0.0, %v423
    %425 = vmatmul.f32.gmra.mxu0 %v380
    %v426 = vpop.f32.mrf.mxu0
    %v427 = vadd.f32 0.0, %v426
    %428 = vmatmul.f32.gmra.mxu0 %v383
    %v429 = vpop.f32.mrf.mxu0
    %v430 = vadd.f32 0.0, %v429
    %431 = vmatmul.f32.gmra.mxu0 %v386
    %v432 = vpop.f32.mrf.mxu0
    %v433 = vadd.f32 0.0, %v432
    %434 = vmatmul.f32.gmra.mxu0 %v389
    %v435 = vpop.f32.mrf.mxu0
    %v436 = vadd.f32 0.0, %v435
    %437 = vdwg.mxu0
    %v438 = vperm.slane %v360, 0
    %439 = vmatpush.msra.mxu0 0.0
    %440 = vmatpush.msra.mxu0 0.0
    %441 = vmatpush.msra.mxu0 0.0
    %442 = vmatpush.msra.mxu0 0.0
    %443 = vmatpush.msra.mxu0 0.0
    %444 = vmatpush.msra.mxu0 0.0
    %445 = vmatpush.msra.mxu0 %v436
    %446 = vmatpush.msra.mxu0 %v433
    %447 = vmatpush.msra.mxu0 %v430
    %448 = vmatpush.msra.mxu0 %v427
    %449 = vmatpush.msra.mxu0 %v424
    %450 = vmatpush.msra.mxu0 %v421
    %451 = vmatpush.msra.mxu0 %v418
    %452 = vmatpush.msra.mxu0 %v415
    %453 = vmatpush.msra.mxu0 %v412
    %454 = vmatpush.msra.mxu0 %v409
    %455 = vmatmul.f32.gmra.mxu0 %v134
    %v456 = vpop.f32.mrf.mxu0
    %v457 = vadd.f32 %v438, %v456
    %458 = vmatmul.f32.gmra.mxu0 %v137
    %v459 = vpop.f32.mrf.mxu0
    %v460 = vadd.f32 %v438, %v459
    %461 = vmatmul.f32.gmra.mxu0 %v140
    %v462 = vpop.f32.mrf.mxu0
    %v463 = vadd.f32 %v438, %v462
    %464 = vmatmul.f32.gmra.mxu0 %v143
    %v465 = vpop.f32.mrf.mxu0
    %v466 = vadd.f32 %v438, %v465
    %467 = vmatmul.f32.gmra.mxu0 %v146
    %v468 = vpop.f32.mrf.mxu0
    %v469 = vadd.f32 %v438, %v468
    %470 = vmatmul.f32.gmra.mxu0 %v149
    %v471 = vpop.f32.mrf.mxu0
    %v472 = vadd.f32 %v438, %v471
    %473 = vmatmul.f32.gmra.mxu0 %v152
    %v474 = vpop.f32.mrf.mxu0
    %v475 = vadd.f32 %v438, %v474
    %476 = vmatmul.f32.gmra.mxu0 %v155
    %v477 = vpop.f32.mrf.mxu0
    %v478 = vadd.f32 %v438, %v477
    %479 = vmatmul.f32.gmra.mxu0 %v158
    %v480 = vpop.f32.mrf.mxu0
    %v481 = vadd.f32 %v438, %v480
    %482 = vmatmul.f32.gmra.mxu0 %v161
    %v483 = vpop.f32.mrf.mxu0
    %v484 = vadd.f32 %v438, %v483
    %485 = vdwg.mxu0
    %v486 = vld [vmem:[%s3 + $0x48] sm:$0xff]
    %v487 = vld [vmem:[%s3 + $0x50] sm:$0xff]
    %v488 = vld [vmem:[%s3 + $0x58] sm:$0xff]
    %v489 = vld [vmem:[%s3 + $0x60] sm:$0xff]
    %v491 = vsel %vm53, 0.0, 0
    %493 = vmatpush.msra.mxu0 0.0
    %494 = vmatpush.msra.mxu0 0.0
    %495 = vmatpush.msra.mxu0 0.0
    %496 = vmatpush.msra.mxu0 0.0
    %497 = vmatpush.msra.mxu0 0.0
    %498 = vmatpush.msra.mxu0 0.0
    %499 = vmatpush.msra.mxu0 0.0
    %500 = vmatpush.msra.mxu0 0.0
    %501 = vmatpush.msra.mxu0 0.0
    %502 = vmatpush.msra.mxu0 0.0
    %503 = vmatpush.msra.mxu0 0.0
    %504 = vmatpush.msra.mxu0 0.0
    %505 = vmatpush.msra.mxu0 0.0
    %506 = vmatpush.msra.mxu0 0.0
    %507 = vmatpush.msra.mxu0 %v487
    %508 = vmatpush.msra.mxu0 %v486
    %509 = vmatmul.f32.gmra.mxu0 %v491
    %v510 = vpop.f32.mrf.mxu0
    %v511 = vadd.f32 0.0, %v510
    %512 = vmatmul.f32.gmra.mxu0 %v491
    %v513 = vpop.f32.mrf.mxu0
    %v514 = vadd.f32 0.0, %v513
    %515 = vdwg.mxu0
    %v516 = vadd.f32 %v457, %v511
    %v517 = vadd.f32 %v460, %v514
    %v518 = vxor.u32 %v516, 2147483648
    %v519 = vxor.u32 %v517, 2147483648
    %v520 = vmul.f32 %v518, 1.442695
    %v521 = vpow.pop %v520
    %v522 = vmul.f32 %v519, 1.442695
    %v523 = vpow.pop %v522
    %v524 = vadd.f32 %v521, 1.0
    %v525 = vadd.f32 %v523, 1.0
    %v526 = vrcp.pop %v524
    %v527 = vmul.f32 %v524, %v526
    %v528 = vsub.f32 1.0, %v527
    %v529 = vmul.f32 %v526, %v528
    %v530 = vadd.f32 %v526, %v529
    %vm531 = vweird.f32 %v524
    %vm532 = vweird.f32 %v526
    %vm533 = vmor %vm531, %vm532
    %v534 = vsel %vm533, %v526, %v530
    %v535 = vand.u32 2147483647, %v524
    %vm536 = vcmp.eq.f32.partialorder %v535, 8.507059e+37
    %v537 = vand.u32 %v524, 2147483648
    %v538 = vor.u32 1.1754944e-38, %v537
    %v539 = vsel %vm536, %v538, %v534
    %v540 = vmul.f32 1.0, %v539
    %v541 = vrcp.pop %v525
    %v542 = vmul.f32 %v525, %v541
    %v543 = vsub.f32 1.0, %v542
    %v544 = vmul.f32 %v541, %v543
    %v545 = vadd.f32 %v541, %v544
    %vm546 = vweird.f32 %v525
    %vm547 = vweird.f32 %v541
    %vm548 = vmor %vm546, %vm547
    %v549 = vsel %vm548, %v541, %v545
    %v550 = vand.u32 2147483647, %v525
    %vm551 = vcmp.eq.f32.partialorder %v550, 8.507059e+37
    %v552 = vand.u32 %v525, 2147483648
    %v553 = vor.u32 1.1754944e-38, %v552
    %v554 = vsel %vm551, %v553, %v549
    %v555 = vmul.f32 1.0, %v554
    %v556 = vmul.f32 %v540, 0.0
    %v557 = vmul.f32 %v555, 0.0
    %560 = vrot.lane.b32.xlu0 %v556, 112
    %v561 = vpop.permute.xlu0 %560
    %562 = vrot.lane.b32.xlu0 %v557, 112
    %v563 = vpop.permute.xlu0 %562
    %v564 = vsel %vm53, %v561, 0
    %v566 = vsel %vm53, %v563, 0
    %568 = vmatpush.msra.mxu0 0.0
    %569 = vmatpush.msra.mxu0 0.0
    %570 = vmatpush.msra.mxu0 0.0
    %571 = vmatpush.msra.mxu0 0.0
    %572 = vmatpush.msra.mxu0 0.0
    %573 = vmatpush.msra.mxu0 0.0
    %574 = vmatpush.msra.mxu0 0.0
    %575 = vmatpush.msra.mxu0 0.0
    %576 = vmatpush.msra.mxu0 0.0
    %577 = vmatpush.msra.mxu0 0.0
    %578 = vmatpush.msra.mxu0 0.0
    %579 = vmatpush.msra.mxu0 0.0
    %580 = vmatpush.msra.mxu0 0.0
    %581 = vmatpush.msra.mxu0 0.0
    %582 = vmatpush.msra.mxu0 %v489
    %583 = vmatpush.msra.mxu0 %v488
    %584 = vmatmul.f32.gmra.mxu0 %v564
    %v585 = vpop.f32.mrf.mxu0
    %v586 = vadd.f32 0.0, %v585
    %587 = vmatmul.f32.gmra.mxu0 %v566
    %v588 = vpop.f32.mrf.mxu0
    %v589 = vadd.f32 0.0, %v588
    %590 = vdwg.mxu0
    %593 = vrot.lane.b32.xlu0 %v586, 32
    %v594 = vpop.permute.xlu0 %593
    %595 = vrot.lane.b32.xlu0 %v589, 32
    %v596 = vpop.permute.xlu0 %595
    %v599 = vadd.f32 %v457, %v594
    %v600 = vadd.f32 %v460, %v596
    %v601 = vtanh.pop %v599
    %v602 = vtanh.pop %v600
    %v603 = vsub.f32 1.0, %v540
    %v604 = vsub.f32 1.0, %v555
    %607 = vrot.lane.b32.xlu0 %v601, 96
    %v608 = vpop.permute.xlu0 %607
    %609 = vrot.lane.b32.xlu0 %v602, 96
    %v610 = vpop.permute.xlu0 %609
    %v613 = vmul.f32 %v603, %v608
    %v614 = vmul.f32 %v604, %v610
    %v615 = vadd.f32 %v556, %v613
    %v616 = vadd.f32 %v557, %v614
    %s617 = sld [smem:[#allocation2]]
    %v618 = vstv %s617
    %v619 = vmul.f32 %v618, %v615
    %v620 = vmul.f32 %v618, %v616
    %v621 = vadd.f32 %v619, 0.0
    %v622 = vadd.f32 %v620, 0.0
    %v624 = vsel %vm53, %v615, 0
    %v627 = vsel %vm53, %v616, 0
    %629 = vmatpush.msra.mxu0 0.0
    %630 = vmatpush.msra.mxu0 0.0
    %631 = vmatpush.msra.mxu0 0.0
    %632 = vmatpush.msra.mxu0 0.0
    %633 = vmatpush.msra.mxu0 0.0
    %634 = vmatpush.msra.mxu0 0.0
    %635 = vmatpush.msra.mxu0 0.0
    %636 = vmatpush.msra.mxu0 0.0
    %637 = vmatpush.msra.mxu0 0.0
    %638 = vmatpush.msra.mxu0 0.0
    %639 = vmatpush.msra.mxu0 0.0
    %640 = vmatpush.msra.mxu0 0.0
    %641 = vmatpush.msra.mxu0 0.0
    %642 = vmatpush.msra.mxu0 0.0
    %643 = vmatpush.msra.mxu0 %v487
    %644 = vmatpush.msra.mxu0 %v486
    %645 = vmatmul.f32.gmra.mxu0 %v624
    %v646 = vpop.f32.mrf.mxu0
    %v647 = vadd.f32 0.0, %v646
    %648 = vmatmul.f32.gmra.mxu0 %v627
    %v649 = vpop.f32.mrf.mxu0
    %v650 = vadd.f32 0.0, %v649
    %651 = vdwg.mxu0
    %v652 = vadd.f32 %v463, %v647
    %v653 = vadd.f32 %v466, %v650
    %v654 = vxor.u32 %v652, 2147483648
    %v655 = vxor.u32 %v653, 2147483648
    %v656 = vmul.f32 %v654, 1.442695
    %v657 = vpow.pop %v656
    %v658 = vmul.f32 %v655, 1.442695
    %v659 = vpow.pop %v658
    %v660 = vadd.f32 %v657, 1.0
    %v661 = vadd.f32 %v659, 1.0
    %v662 = vrcp.pop %v660
    %v663 = vmul.f32 %v660, %v662
    %v664 = vsub.f32 1.0, %v663
    %v665 = vmul.f32 %v662, %v664
    %v666 = vadd.f32 %v662, %v665
    %vm667 = vweird.f32 %v660
    %vm668 = vweird.f32 %v662
    %vm669 = vmor %vm667, %vm668
    %v670 = vsel %vm669, %v662, %v666
    %v671 = vand.u32 2147483647, %v660
    %vm672 = vcmp.eq.f32.partialorder %v671, 8.507059e+37
    %v673 = vand.u32 %v660, 2147483648
    %v674 = vor.u32 1.1754944e-38, %v673
    %v675 = vsel %vm672, %v674, %v670
    %v676 = vmul.f32 1.0, %v675
    %v677 = vrcp.pop %v661
    %v678 = vmul.f32 %v661, %v677
    %v679 = vsub.f32 1.0, %v678
    %v680 = vmul.f32 %v677, %v679
    %v681 = vadd.f32 %v677, %v680
    %vm682 = vweird.f32 %v661
    %vm683 = vweird.f32 %v677
    %vm684 = vmor %vm682, %vm683
    %v685 = vsel %vm684, %v677, %v681
    %v686 = vand.u32 2147483647, %v661
    %vm687 = vcmp.eq.f32.partialorder %v686, 8.507059e+37
    %v688 = vand.u32 %v661, 2147483648
    %v689 = vor.u32 1.1754944e-38, %v688
    %v690 = vsel %vm687, %v689, %v685
    %v691 = vmul.f32 1.0, %v690
    %694 = vrot.lane.b32.xlu0 %v676, 112
    %v695 = vpop.permute.xlu0 %694
    %696 = vrot.lane.b32.xlu0 %v691, 112
    %v697 = vpop.permute.xlu0 %696
    %v700 = vmul.f32 %v615, %v695
    %v701 = vmul.f32 %v616, %v697
    %v703 = vsel %vm53, %v700, 0
    %v706 = vsel %vm53, %v701, 0
    %708 = vmatpush.msra.mxu0 0.0
    %709 = vmatpush.msra.mxu0 0.0
    %710 = vmatpush.msra.mxu0 0.0
    %711 = vmatpush.msra.mxu0 0.0
    %712 = vmatpush.msra.mxu0 0.0
    %713 = vmatpush.msra.mxu0 0.0
    %714 = vmatpush.msra.mxu0 0.0
    %715 = vmatpush.msra.mxu0 0.0
    %716 = vmatpush.msra.mxu0 0.0
    %717 = vmatpush.msra.mxu0 0.0
    %718 = vmatpush.msra.mxu0 0.0
    %719 = vmatpush.msra.mxu0 0.0
    %720 = vmatpush.msra.mxu0 0.0
    %721 = vmatpush.msra.mxu0 0.0
    %722 = vmatpush.msra.mxu0 %v489
    %723 = vmatpush.msra.mxu0 %v488
    %724 = vmatmul.f32.gmra.mxu0 %v703
    %v725 = vpop.f32.mrf.mxu0
    %v726 = vadd.f32 0.0, %v725
    %727 = vmatmul.f32.gmra.mxu0 %v706
    %v728 = vpop.f32.mrf.mxu0
    %v729 = vadd.f32 0.0, %v728
    %730 = vdwg.mxu0
    %733 = vrot.lane.b32.xlu0 %v726, 32
    %v734 = vpop.permute.xlu0 %733
    %735 = vrot.lane.b32.xlu0 %v729, 32
    %v736 = vpop.permute.xlu0 %735
    %v739 = vadd.f32 %v463, %v734
    %v740 = vadd.f32 %v466, %v736
    %v741 = vtanh.pop %v739
    %v742 = vtanh.pop %v740
    %v743 = vmul.f32 %v676, %v615
    %v744 = vmul.f32 %v691, %v616
    %v745 = vsub.f32 1.0, %v676
    %v746 = vsub.f32 1.0, %v691
    %749 = vrot.lane.b32.xlu0 %v741, 96
    %v750 = vpop.permute.xlu0 %749
    %751 = vrot.lane.b32.xlu0 %v742, 96
    %v752 = vpop.permute.xlu0 %751
    %v755 = vmul.f32 %v745, %v750
    %v756 = vmul.f32 %v746, %v752
    %v757 = vadd.f32 %v743, %v755
    %v758 = vadd.f32 %v744, %v756
    %s759 = sld [smem:[#allocation2 + $0x1]]
    %v760 = vstv %s759
    %v761 = vmul.f32 %v760, %v757
    %v762 = vmul.f32 %v760, %v758
    %v763 = vadd.f32 %v621, %v761
    %v764 = vadd.f32 %v622, %v762
    %v766 = vsel %vm53, %v757, 0
    %v769 = vsel %vm53, %v758, 0
    %771 = vmatpush.msra.mxu0 0.0
    %772 = vmatpush.msra.mxu0 0.0
    %773 = vmatpush.msra.mxu0 0.0
    %774 = vmatpush.msra.mxu0 0.0
    %775 = vmatpush.msra.mxu0 0.0
    %776 = vmatpush.msra.mxu0 0.0
    %777 = vmatpush.msra.mxu0 0.0
    %778 = vmatpush.msra.mxu0 0.0
    %779 = vmatpush.msra.mxu0 0.0
    %780 = vmatpush.msra.mxu0 0.0
    %781 = vmatpush.msra.mxu0 0.0
    %782 = vmatpush.msra.mxu0 0.0
    %783 = vmatpush.msra.mxu0 0.0
    %784 = vmatpush.msra.mxu0 0.0
    %785 = vmatpush.msra.mxu0 %v487
    %786 = vmatpush.msra.mxu0 %v486
    %787 = vmatmul.f32.gmra.mxu0 %v766
    %v788 = vpop.f32.mrf.mxu0
    %v789 = vadd.f32 0.0, %v788
    %790 = vmatmul.f32.gmra.mxu0 %v769
    %v791 = vpop.f32.mrf.mxu0
    %v792 = vadd.f32 0.0, %v791
    %793 = vdwg.mxu0
    %v794 = vadd.f32 %v469, %v789
    %v795 = vadd.f32 %v472, %v792
    %v796 = vxor.u32 %v794, 2147483648
    %v797 = vxor.u32 %v795, 2147483648
    %v798 = vmul.f32 %v796, 1.442695
    %v799 = vpow.pop %v798
    %v800 = vmul.f32 %v797, 1.442695
    %v801 = vpow.pop %v800
    %v802 = vadd.f32 %v799, 1.0
    %v803 = vadd.f32 %v801, 1.0
    %v804 = vrcp.pop %v802
    %v805 = vmul.f32 %v802, %v804
    %v806 = vsub.f32 1.0, %v805
    %v807 = vmul.f32 %v804, %v806
    %v808 = vadd.f32 %v804, %v807
    %vm809 = vweird.f32 %v802
    %vm810 = vweird.f32 %v804
    %vm811 = vmor %vm809, %vm810
    %v812 = vsel %vm811, %v804, %v808
    %v813 = vand.u32 2147483647, %v802
    %vm814 = vcmp.eq.f32.partialorder %v813, 8.507059e+37
    %v815 = vand.u32 %v802, 2147483648
    %v816 = vor.u32 1.1754944e-38, %v815
    %v817 = vsel %vm814, %v816, %v812
    %v818 = vmul.f32 1.0, %v817
    %v819 = vrcp.pop %v803
    %v820 = vmul.f32 %v803, %v819
    %v821 = vsub.f32 1.0, %v820
    %v822 = vmul.f32 %v819, %v821
    %v823 = vadd.f32 %v819, %v822
    %vm824 = vweird.f32 %v803
    %vm825 = vweird.f32 %v819
    %vm826 = vmor %vm824, %vm825
    %v827 = vsel %vm826, %v819, %v823
    %v828 = vand.u32 2147483647, %v803
    %vm829 = vcmp.eq.f32.partialorder %v828, 8.507059e+37
    %v830 = vand.u32 %v803, 2147483648
    %v831 = vor.u32 1.1754944e-38, %v830
    %v832 = vsel %vm829, %v831, %v827
    %v833 = vmul.f32 1.0, %v832
    %836 = vrot.lane.b32.xlu0 %v818, 112
    %v837 = vpop.permute.xlu0 %836
    %838 = vrot.lane.b32.xlu0 %v833, 112
    %v839 = vpop.permute.xlu0 %838
    %v842 = vmul.f32 %v757, %v837
    %v843 = vmul.f32 %v758, %v839
    %v845 = vsel %vm53, %v842, 0
    %v848 = vsel %vm53, %v843, 0
    %850 = vmatpush.msra.mxu0 0.0
    %851 = vmatpush.msra.mxu0 0.0
    %852 = vmatpush.msra.mxu0 0.0
    %853 = vmatpush.msra.mxu0 0.0
    %854 = vmatpush.msra.mxu0 0.0
    %855 = vmatpush.msra.mxu0 0.0
    %856 = vmatpush.msra.mxu0 0.0
    %857 = vmatpush.msra.mxu0 0.0
    %858 = vmatpush.msra.mxu0 0.0
    %859 = vmatpush.msra.mxu0 0.0
    %860 = vmatpush.msra.mxu0 0.0
    %861 = vmatpush.msra.mxu0 0.0
    %862 = vmatpush.msra.mxu0 0.0
    %863 = vmatpush.msra.mxu0 0.0
    %864 = vmatpush.msra.mxu0 %v489
    %865 = vmatpush.msra.mxu0 %v488
    %866 = vmatmul.f32.gmra.mxu0 %v845
    %v867 = vpop.f32.mrf.mxu0
    %v868 = vadd.f32 0.0, %v867
    %869 = vmatmul.f32.gmra.mxu0 %v848
    %v870 = vpop.f32.mrf.mxu0
    %v871 = vadd.f32 0.0, %v870
    %872 = vdwg.mxu0
    %875 = vrot.lane.b32.xlu0 %v868, 32
    %v876 = vpop.permute.xlu0 %875
    %877 = vrot.lane.b32.xlu0 %v871, 32
    %v878 = vpop.permute.xlu0 %877
    %v881 = vadd.f32 %v469, %v876
    %v882 = vadd.f32 %v472, %v878
    %v883 = vtanh.pop %v881
    %v884 = vtanh.pop %v882
    %v885 = vmul.f32 %v818, %v757
    %v886 = vmul.f32 %v833, %v758
    %v887 = vsub.f32 1.0, %v818
    %v888 = vsub.f32 1.0, %v833
    %891 = vrot.lane.b32.xlu0 %v883, 96
    %v892 = vpop.permute.xlu0 %891
    %893 = vrot.lane.b32.xlu0 %v884, 96
    %v894 = vpop.permute.xlu0 %893
    %v897 = vmul.f32 %v887, %v892
    %v898 = vmul.f32 %v888, %v894
    %v899 = vadd.f32 %v885, %v897
    %v900 = vadd.f32 %v886, %v898
    %s901 = sld [smem:[#allocation2 + $0x2]]
    %v902 = vstv %s901
    %v903 = vmul.f32 %v902, %v899
    %v904 = vmul.f32 %v902, %v900
    %v905 = vadd.f32 %v763, %v903
    %v906 = vadd.f32 %v764, %v904
    %v908 = vsel %vm53, %v899, 0
    %v911 = vsel %vm53, %v900, 0
    %913 = vmatpush.msra.mxu0 0.0
    %914 = vmatpush.msra.mxu0 0.0
    %915 = vmatpush.msra.mxu0 0.0
    %916 = vmatpush.msra.mxu0 0.0
    %917 = vmatpush.msra.mxu0 0.0
    %918 = vmatpush.msra.mxu0 0.0
    %919 = vmatpush.msra.mxu0 0.0
    %920 = vmatpush.msra.mxu0 0.0
    %921 = vmatpush.msra.mxu0 0.0
    %922 = vmatpush.msra.mxu0 0.0
    %923 = vmatpush.msra.mxu0 0.0
    %924 = vmatpush.msra.mxu0 0.0
    %925 = vmatpush.msra.mxu0 0.0
    %926 = vmatpush.msra.mxu0 0.0
    %927 = vmatpush.msra.mxu0 %v487
    %928 = vmatpush.msra.mxu0 %v486
    %929 = vmatmul.f32.gmra.mxu0 %v908
    %v930 = vpop.f32.mrf.mxu0
    %v931 = vadd.f32 0.0, %v930
    %932 = vmatmul.f32.gmra.mxu0 %v911
    %v933 = vpop.f32.mrf.mxu0
    %v934 = vadd.f32 0.0, %v933
    %935 = vdwg.mxu0
    %v936 = vadd.f32 %v475, %v931
    %v937 = vadd.f32 %v478, %v934
    %v938 = vxor.u32 %v936, 2147483648
    %v939 = vxor.u32 %v937, 2147483648
    %v940 = vmul.f32 %v938, 1.442695
    %v941 = vpow.pop %v940
    %v942 = vmul.f32 %v939, 1.442695
    %v943 = vpow.pop %v942
    %v944 = vadd.f32 %v941, 1.0
    %v945 = vadd.f32 %v943, 1.0
    %v946 = vrcp.pop %v944
    %v947 = vmul.f32 %v944, %v946
    %v948 = vsub.f32 1.0, %v947
    %v949 = vmul.f32 %v946, %v948
    %v950 = vadd.f32 %v946, %v949
    %vm951 = vweird.f32 %v944
    %vm952 = vweird.f32 %v946
    %vm953 = vmor %vm951, %vm952
    %v954 = vsel %vm953, %v946, %v950
    %v955 = vand.u32 2147483647, %v944
    %vm956 = vcmp.eq.f32.partialorder %v955, 8.507059e+37
    %v957 = vand.u32 %v944, 2147483648
    %v958 = vor.u32 1.1754944e-38, %v957
    %v959 = vsel %vm956, %v958, %v954
    %v960 = vmul.f32 1.0, %v959
    %v961 = vrcp.pop %v945
    %v962 = vmul.f32 %v945, %v961
    %v963 = vsub.f32 1.0, %v962
    %v964 = vmul.f32 %v961, %v963
    %v965 = vadd.f32 %v961, %v964
    %vm966 = vweird.f32 %v945
    %vm967 = vweird.f32 %v961
    %vm968 = vmor %vm966, %vm967
    %v969 = vsel %vm968, %v961, %v965
    %v970 = vand.u32 2147483647, %v945
    %vm971 = vcmp.eq.f32.partialorder %v970, 8.507059e+37
    %v972 = vand.u32 %v945, 2147483648
    %v973 = vor.u32 1.1754944e-38, %v972
    %v974 = vsel %vm971, %v973, %v969
    %v975 = vmul.f32 1.0, %v974
    %978 = vrot.lane.b32.xlu0 %v960, 112
    %v979 = vpop.permute.xlu0 %978
    %980 = vrot.lane.b32.xlu0 %v975, 112
    %v981 = vpop.permute.xlu0 %980
    %v984 = vmul.f32 %v899, %v979
    %v985 = vmul.f32 %v900, %v981
    %v987 = vsel %vm53, %v984, 0
    %v990 = vsel %vm53, %v985, 0
    %992 = vmatpush.msra.mxu0 0.0
    %993 = vmatpush.msra.mxu0 0.0
    %994 = vmatpush.msra.mxu0 0.0
    %995 = vmatpush.msra.mxu0 0.0
    %996 = vmatpush.msra.mxu0 0.0
    %997 = vmatpush.msra.mxu0 0.0
    %998 = vmatpush.msra.mxu0 0.0
    %999 = vmatpush.msra.mxu0 0.0
    %1000 = vmatpush.msra.mxu0 0.0
    %1001 = vmatpush.msra.mxu0 0.0
    %1002 = vmatpush.msra.mxu0 0.0
    %1003 = vmatpush.msra.mxu0 0.0
    %1004 = vmatpush.msra.mxu0 0.0
    %1005 = vmatpush.msra.mxu0 0.0
    %1006 = vmatpush.msra.mxu0 %v489
    %1007 = vmatpush.msra.mxu0 %v488
    %1008 = vmatmul.f32.gmra.mxu0 %v987
    %v1009 = vpop.f32.mrf.mxu0
    %v1010 = vadd.f32 0.0, %v1009
    %1011 = vmatmul.f32.gmra.mxu0 %v990
    %v1012 = vpop.f32.mrf.mxu0
    %v1013 = vadd.f32 0.0, %v1012
    %1014 = vdwg.mxu0
    %1017 = vrot.lane.b32.xlu0 %v1010, 32
    %v1018 = vpop.permute.xlu0 %1017
    %1019 = vrot.lane.b32.xlu0 %v1013, 32
    %v1020 = vpop.permute.xlu0 %1019
    %v1023 = vadd.f32 %v475, %v1018
    %v1024 = vadd.f32 %v478, %v1020
    %v1025 = vtanh.pop %v1023
    %v1026 = vtanh.pop %v1024
    %v1027 = vmul.f32 %v960, %v899
    %v1028 = vmul.f32 %v975, %v900
    %v1029 = vsub.f32 1.0, %v960
    %v1030 = vsub.f32 1.0, %v975
    %1033 = vrot.lane.b32.xlu0 %v1025, 96
    %v1034 = vpop.permute.xlu0 %1033
    %1035 = vrot.lane.b32.xlu0 %v1026, 96
    %v1036 = vpop.permute.xlu0 %1035
    %v1039 = vmul.f32 %v1029, %v1034
    %v1040 = vmul.f32 %v1030, %v1036
    %v1041 = vadd.f32 %v1027, %v1039
    %v1042 = vadd.f32 %v1028, %v1040
    %s1043 = sld [smem:[#allocation2 + $0x3]]
    %v1044 = vstv %s1043
    %v1045 = vmul.f32 %v1044, %v1041
    %v1046 = vmul.f32 %v1044, %v1042
    %v1047 = vadd.f32 %v905, %v1045
    %v1048 = vadd.f32 %v906, %v1046
    %v1050 = vsel %vm53, %v1041, 0
    %v1053 = vsel %vm53, %v1042, 0
    %1055 = vmatpush.msra.mxu0 0.0
    %1056 = vmatpush.msra.mxu0 0.0
    %1057 = vmatpush.msra.mxu0 0.0
    %1058 = vmatpush.msra.mxu0 0.0
    %1059 = vmatpush.msra.mxu0 0.0
    %1060 = vmatpush.msra.mxu0 0.0
    %1061 = vmatpush.msra.mxu0 0.0
    %1062 = vmatpush.msra.mxu0 0.0
    %1063 = vmatpush.msra.mxu0 0.0
    %1064 = vmatpush.msra.mxu0 0.0
    %1065 = vmatpush.msra.mxu0 0.0
    %1066 = vmatpush.msra.mxu0 0.0
    %1067 = vmatpush.msra.mxu0 0.0
    %1068 = vmatpush.msra.mxu0 0.0
    %1069 = vmatpush.msra.mxu0 %v487
    %1070 = vmatpush.msra.mxu0 %v486
    %1071 = vmatmul.f32.gmra.mxu0 %v1050
    %v1072 = vpop.f32.mrf.mxu0
    %v1073 = vadd.f32 0.0, %v1072
    %1074 = vmatmul.f32.gmra.mxu0 %v1053
    %v1075 = vpop.f32.mrf.mxu0
    %v1076 = vadd.f32 0.0, %v1075
    %1077 = vdwg.mxu0
    %v1078 = vadd.f32 %v481, %v1073
    %v1079 = vadd.f32 %v484, %v1076
    %v1080 = vxor.u32 %v1078, 2147483648
    %v1081 = vxor.u32 %v1079, 2147483648
    %v1082 = vmul.f32 %v1080, 1.442695
    %v1083 = vpow.pop %v1082
    %v1084 = vmul.f32 %v1081, 1.442695
    %v1085 = vpow.pop %v1084
    %v1086 = vadd.f32 %v1083, 1.0
    %v1087 = vadd.f32 %v1085, 1.0
    %v1088 = vrcp.pop %v1086
    %v1089 = vmul.f32 %v1086, %v1088
    %v1090 = vsub.f32 1.0, %v1089
    %v1091 = vmul.f32 %v1088, %v1090
    %v1092 = vadd.f32 %v1088, %v1091
    %vm1093 = vweird.f32 %v1086
    %vm1094 = vweird.f32 %v1088
    %vm1095 = vmor %vm1093, %vm1094
    %v1096 = vsel %vm1095, %v1088, %v1092
    %v1097 = vand.u32 2147483647, %v1086
    %vm1098 = vcmp.eq.f32.partialorder %v1097, 8.507059e+37
    %v1099 = vand.u32 %v1086, 2147483648
    %v1100 = vor.u32 1.1754944e-38, %v1099
    %v1101 = vsel %vm1098, %v1100, %v1096
    %v1102 = vmul.f32 1.0, %v1101
    %v1103 = vrcp.pop %v1087
    %v1104 = vmul.f32 %v1087, %v1103
    %v1105 = vsub.f32 1.0, %v1104
    %v1106 = vmul.f32 %v1103, %v1105
    %v1107 = vadd.f32 %v1103, %v1106
    %vm1108 = vweird.f32 %v1087
    %vm1109 = vweird.f32 %v1103
    %vm1110 = vmor %vm1108, %vm1109
    %v1111 = vsel %vm1110, %v1103, %v1107
    %v1112 = vand.u32 2147483647, %v1087
    %vm1113 = vcmp.eq.f32.partialorder %v1112, 8.507059e+37
    %v1114 = vand.u32 %v1087, 2147483648
    %v1115 = vor.u32 1.1754944e-38, %v1114
    %v1116 = vsel %vm1113, %v1115, %v1111
    %v1117 = vmul.f32 1.0, %v1116
    %1120 = vrot.lane.b32.xlu0 %v1102, 112
    %v1121 = vpop.permute.xlu0 %1120
    %1122 = vrot.lane.b32.xlu0 %v1117, 112
    %v1123 = vpop.permute.xlu0 %1122
    %v1126 = vmul.f32 %v1041, %v1121
    %v1127 = vmul.f32 %v1042, %v1123
    %v1129 = vsel %vm53, %v1126, 0
    %v1132 = vsel %vm53, %v1127, 0
    %1134 = vmatpush.msra.mxu0 0.0
    %1135 = vmatpush.msra.mxu0 0.0
    %1136 = vmatpush.msra.mxu0 0.0
    %1137 = vmatpush.msra.mxu0 0.0
    %1138 = vmatpush.msra.mxu0 0.0
    %1139 = vmatpush.msra.mxu0 0.0
    %1140 = vmatpush.msra.mxu0 0.0
    %1141 = vmatpush.msra.mxu0 0.0
    %1142 = vmatpush.msra.mxu0 0.0
    %1143 = vmatpush.msra.mxu0 0.0
    %1144 = vmatpush.msra.mxu0 0.0
    %1145 = vmatpush.msra.mxu0 0.0
    %1146 = vmatpush.msra.mxu0 0.0
    %1147 = vmatpush.msra.mxu0 0.0
    %1148 = vmatpush.msra.mxu0 %v489
    %1149 = vmatpush.msra.mxu0 %v488
    %1150 = vmatmul.f32.gmra.mxu0 %v1129
    %v1151 = vpop.f32.mrf.mxu0
    %v1152 = vadd.f32 0.0, %v1151
    %1153 = vmatmul.f32.gmra.mxu0 %v1132
    %v1154 = vpop.f32.mrf.mxu0
    %v1155 = vadd.f32 0.0, %v1154
    %1156 = vdwg.mxu0
    %1159 = vrot.lane.b32.xlu0 %v1152, 32
    %v1160 = vpop.permute.xlu0 %1159
    %1161 = vrot.lane.b32.xlu0 %v1155, 32
    %v1162 = vpop.permute.xlu0 %1161
    %v1165 = vadd.f32 %v481, %v1160
    %v1166 = vadd.f32 %v484, %v1162
    %v1167 = vtanh.pop %v1165
    %v1168 = vtanh.pop %v1166
    %v1169 = vmul.f32 %v1102, %v1041
    %v1170 = vmul.f32 %v1117, %v1042
    %v1171 = vsub.f32 1.0, %v1102
    %v1172 = vsub.f32 1.0, %v1117
    %1175 = vrot.lane.b32.xlu0 %v1167, 96
    %v1176 = vpop.permute.xlu0 %1175
    %1177 = vrot.lane.b32.xlu0 %v1168, 96
    %v1178 = vpop.permute.xlu0 %1177
    %v1181 = vmul.f32 %v1171, %v1176
    %v1182 = vmul.f32 %v1172, %v1178
    %v1183 = vadd.f32 %v1169, %v1181
    %v1184 = vadd.f32 %v1170, %v1182
    %s1185 = sld [smem:[#allocation2 + $0x4]]
    %v1186 = vstv %s1185
    %v1187 = vmul.f32 %v1186, %v1183
    %v1188 = vmul.f32 %v1186, %v1184
    %v1189 = vadd.f32 %v1047, %v1187
    %v1190 = vadd.f32 %v1048, %v1188
    %v1191 = vld [vmem:[%s3 + $0x68] sm:$0xff]
    %v1192 = vld [vmem:[%s3 + $0x70] sm:$0xff]
    %v1193 = vld [vmem:[%s3 + $0x78] sm:$0x1]
    %v1194 = vperm.slane %v1193, 0
    %v1196 = vsel %vm53, %v1189, 0
    %v1199 = vsel %vm53, %v1190, 0
    %1201 = vmatpush.msra.mxu0 0.0
    %1202 = vmatpush.msra.mxu0 0.0
    %1203 = vmatpush.msra.mxu0 0.0
    %1204 = vmatpush.msra.mxu0 0.0
    %1205 = vmatpush.msra.mxu0 0.0
    %1206 = vmatpush.msra.mxu0 0.0
    %1207 = vmatpush.msra.mxu0 0.0
    %1208 = vmatpush.msra.mxu0 0.0
    %1209 = vmatpush.msra.mxu0 0.0
    %1210 = vmatpush.msra.mxu0 0.0
    %1211 = vmatpush.msra.mxu0 0.0
    %1212 = vmatpush.msra.mxu0 0.0
    %1213 = vmatpush.msra.mxu0 0.0
    %1214 = vmatpush.msra.mxu0 0.0
    %1215 = vmatpush.msra.mxu0 %v1192
    %1216 = vmatpush.msra.mxu0 %v1191
    %1217 = vmatmul.f32.gmra.mxu0 %v1196
    %v1218 = vpop.f32.mrf.mxu0
    %v1219 = vadd.f32 %v1194, %v1218
    %1220 = vmatmul.f32.gmra.mxu0 %v1199
    %v1221 = vpop.f32.mrf.mxu0
    %v1222 = vadd.f32 %v1194, %v1221
    %1223 = vdwg.mxu0
    %vm1224 = vcmask 15360
    %v1225 = vsel %vm1224, %v1219, -inf
    %1226 = vmax.xlane.f32.xlu0 %v1225
    %v1227 = vpop.xlane.xlu0 %1226
    %v1228 = vsel %vm1224, %v1222, -inf
    %1229 = vmax.xlane.f32.xlu0 %v1228
    %v1230 = vpop.xlane.xlu0 %1229
    %v1231 = vsub.f32 %v1219, %v1227
    %v1232 = vsub.f32 %v1222, %v1230
    %v1233 = vmul.f32 %v1231, 1.442695
    %v1234 = vpow.pop %v1233
    %v1235 = vmul.f32 %v1232, 1.442695
    %v1236 = vpow.pop %v1235
    %v1237 = vsel %vm1224, %v1234, 0.0
    %1238 = vadd.xlane.f32.xlu0 %v1237
    %v1239 = vpop.xlane.xlu0 %1238
    %v1240 = vsel %vm1224, %v1236, 0.0
    %1241 = vadd.xlane.f32.xlu0 %v1240
    %v1242 = vpop.xlane.xlu0 %1241
    %v1243 = vlog2.pop %v1239
    %v1244 = vmul.f32 %v1243, 0.6931472
    %v1245 = vlog2.pop %v1242
    %v1246 = vmul.f32 %v1245, 0.6931472
    %v1247 = vsub.f32 %v1231, %v1244
    %v1248 = vsub.f32 %v1232, %v1246
    %1249 = vst.msk [vmem:[%s4] sm:$0xff] %vm1224, %v1247
    %1250 = vst.msk [vmem:[%s4 + $0x8] sm:$0xff] %vm1224, %v1248
    // Predicated region
    $region22: #{time_slice_gnn.1} parent=1 // pred_check
      _
    $region23: #{time_slice_gnn.1} parent=1 // pred_check_branch
      %1252 = sbr.rel (0) target = $region25
    $region24: #{time_slice_gnn.1} parent=1 // pred_region
      _
    $region25: #{time_slice_gnn.1} parent=1 // pred_fallthru
      _
    // Predicated region
    $region26: #{time_slice_gnn.1} parent=1 // pred_check
      _
    $region27: #{time_slice_gnn.1} parent=1 // pred_check_branch
      %1254 = sbr.rel (0) target = $region29
    $region28: #{time_slice_gnn.1} parent=1 // pred_region
      _
    $region29: #{time_slice_gnn.1} parent=1 // pred_fallthru
      _
    %1255 = vsyncpa [#allocation3], 1

</llo_original>
